<compile_context>
chip_gen: v5e
topology: v5e:2x2
jax: 0.10.0
libtpu: 0.0.40
codegen_flags: <defaults>
</compile_context>

<pallas_src>
import jax
import jax.numpy as jnp
from jax.experimental import pallas as pl
from jax.experimental.pallas import tpu as pltpu

IN_DIM = 100
HID_DIM = 128
OUT_DIM = 784


def gnet_kernel(x_ref, w1_ref, b1_ref, w2_ref, b2_ref, o_ref):
    x = x_ref[...]                                                  # (TB, 100)
    # Linear(100, 128) -- f32 MXU matmul, f32 accumulation.
    h = jnp.dot(x, w1_ref[...], preferred_element_type=jnp.float32)
    h = h + b1_ref[...]                                             # (TB, 128)
    # LeakyReLU(0.2)
    h = jnp.maximum(h, 0.2 * h)
    # Dropout(0.3) -> identity in eval mode.
    # Linear(128, 784)
    y = jnp.dot(h, w2_ref[...], preferred_element_type=jnp.float32)
    y = y + b2_ref[...]                                             # (TB, 784)
    # Tanh
    o_ref[...] = jnp.tanh(y)


def _round_up(n, m):
    return ((n + m - 1) // m) * m


def gnet_forward(x, w1, b1, w2, b2, *, tb=512):
    """x: (B, 100) f32; w1: (100,128); b1: (1,128); w2: (128,784); b2: (1,784)."""
    B = x.shape[0]
    b8 = _round_up(B, 8)

    # Batch tile: multiple of 8 (sublane).  Keep at least 2 grid steps when the
    # batch allows it so the "parallel" axis can shard across v7x's two TCs.
    tb = max(8, (tb // 8) * 8)
    if b8 > 8:
        tb = min(tb, _round_up(pl.cdiv(b8, 2), 8))
    tb = min(tb, b8)
    b_pad = _round_up(b8, tb)
    grid = (b_pad // tb,)

    # Only the batch dim is (possibly) padded; K and N stay at native widths.
    x_p = jnp.pad(x, ((0, b_pad - B), (0, 0))) if b_pad != B else x

    # Honest advisory cost: what the kernel actually reads/writes.
    cost = pl.CostEstimate(
        flops=2 * b_pad * (IN_DIM * HID_DIM + HID_DIM * OUT_DIM),
        transcendentals=b_pad * OUT_DIM,
        bytes_accessed=4 * (b_pad * IN_DIM            # x tiles in
                            + IN_DIM * HID_DIM + HID_DIM   # w1, b1 (loaded once)
                            + HID_DIM * OUT_DIM + OUT_DIM  # w2, b2 (loaded once)
                            + b_pad * OUT_DIM),       # output out
    )

    out = pl.pallas_call(
        gnet_kernel,
        out_shape=jax.ShapeDtypeStruct((b_pad, OUT_DIM), jnp.float32),
        grid=grid,
        in_specs=[
            pl.BlockSpec((tb, IN_DIM), lambda i: (i, 0)),         # x tiles
            pl.BlockSpec((IN_DIM, HID_DIM), lambda i: (0, 0)),    # w1 (resident)
            pl.BlockSpec((1, HID_DIM), lambda i: (0, 0)),         # b1 (resident)
            pl.BlockSpec((HID_DIM, OUT_DIM), lambda i: (0, 0)),   # w2 (resident)
            pl.BlockSpec((1, OUT_DIM), lambda i: (0, 0)),         # b2 (resident)
        ],
        out_specs=pl.BlockSpec((tb, OUT_DIM), lambda i: (i, 0)),
        compiler_params=pltpu.CompilerParams(
            dimension_semantics=("parallel",)),
        cost_estimate=cost,
    )(x_p, w1, b1, w2, b2)

    # Only slice (copy) when the batch actually had to be padded.
    return out[:B] if b_pad != B else out


def xavier_uniform(key, fan_in, fan_out):
    # matches nn.init.xavier_uniform_ (gain = 1.0)
    bound = jnp.sqrt(6.0 / (fan_in + fan_out))
    # stored as (in, out) so the kernel does x @ W
    return jax.random.uniform(key, (fan_in, fan_out),
                              minval=-bound, maxval=bound, dtype=jnp.float32)


def init_params(key):
    k1, k2 = jax.random.split(key)
    w1 = xavier_uniform(k1, IN_DIM, HID_DIM)
    b1 = jnp.zeros((1, HID_DIM), dtype=jnp.float32)   # bias filled with 0
    w2 = xavier_uniform(k2, HID_DIM, OUT_DIM)
    b2 = jnp.zeros((1, OUT_DIM), dtype=jnp.float32)
    return w1, b1, w2, b2


if __name__ == "__main__":
    key = jax.random.PRNGKey(0)
    k_params, k_x = jax.random.split(key)

    w1, b1, w2, b2 = init_params(k_params)

    # Small test batch; tb=8 so the grid actually tiles (grid=(4,)) and the
    # unpadded-K / native-784-output paths are exercised.
    B = 32
    x = jax.random.normal(k_x, (B, IN_DIM), dtype=jnp.float32)

    out = gnet_forward(x, w1, b1, w2, b2, tb=8)
    out = jax.block_until_ready(out)

    # sanity: reference in plain JAX
    h_ref = x @ w1 + b1
    h_ref = jnp.where(h_ref > 0, h_ref, 0.2 * h_ref)
    ref = jnp.tanh(h_ref @ w2 + b2)

    assert out.shape == (B, OUT_DIM)
    assert jnp.allclose(out, ref, atol=1e-5, rtol=1e-5)

    print("KERNEL_OK")
</pallas_src>

<mosaic_0001>
module attributes {stable_mosaic.version = 11 : i64} {
  func.func @gnet_kernel(%arg0: i32, %arg1: memref<8x100xf32, #tpu.memory_space<vmem>>, %arg2: memref<100x128xf32, #tpu.memory_space<vmem>>, %arg3: memref<1x128xf32, #tpu.memory_space<vmem>>, %arg4: memref<128x784xf32, #tpu.memory_space<vmem>>, %arg5: memref<1x784xf32, #tpu.memory_space<vmem>>, %arg6: memref<8x784xf32, #tpu.memory_space<vmem>>) attributes {dimension_semantics = [#tpu.dimension_semantics<parallel>], iteration_bounds = array<i64: 4>, scalar_prefetch = 0 : i64, scratch_operands = 0 : i64, tpu.core_type = #tpu.core_type<tc>, window_params = [{transform_indices = @transform_0, window_bounds = array<i64: 8, 100>}, {pipeline_mode = #tpu.pipeline_mode<synchronous>, transform_indices = @transform_1, window_bounds = array<i64: 100, 128>}, {pipeline_mode = #tpu.pipeline_mode<synchronous>, transform_indices = @transform_2, window_bounds = array<i64: 1, 128>}, {pipeline_mode = #tpu.pipeline_mode<synchronous>, transform_indices = @transform_3, window_bounds = array<i64: 128, 784>}, {pipeline_mode = #tpu.pipeline_mode<synchronous>, transform_indices = @transform_4, window_bounds = array<i64: 1, 784>}, {transform_indices = @transform_5, window_bounds = array<i64: 8, 784>}]} {
    %c0 = arith.constant 0 : index
    %c0_0 = arith.constant 0 : index
    %0 = vector.load %arg1[%c0, %c0_0] : memref<8x100xf32, #tpu.memory_space<vmem>>, vector<8x100xf32>
    %c0_1 = arith.constant 0 : index
    %c0_2 = arith.constant 0 : index
    %1 = vector.load %arg2[%c0_1, %c0_2] : memref<100x128xf32, #tpu.memory_space<vmem>>, vector<100x128xf32>
    %cst = arith.constant dense<0.000000e+00> : vector<8x128xf32>
    %2 = tpu.matmul %0, %1, %cst {dimension_numbers = #tpu.dot_dimension_numbers<[1], [0], [0], [1], [0, 0, 1, 1], [], []>} : vector<8x100xf32>, vector<100x128xf32>, vector<8x128xf32> -> vector<8x128xf32>
    %c0_3 = arith.constant 0 : index
    %c0_4 = arith.constant 0 : index
    %3 = vector.load %arg3[%c0_3, %c0_4] : memref<1x128xf32, #tpu.memory_space<vmem>>, vector<1x128xf32>
    %4 = vector.broadcast %3 : vector<1x128xf32> to vector<8x128xf32>
    %5 = arith.addf %2, %4 : vector<8x128xf32>
    %cst_5 = arith.constant 2.000000e-01 : f32
    %6 = vector.broadcast %cst_5 : f32 to vector<8x128xf32>
    %7 = arith.mulf %6, %5 : vector<8x128xf32>
    %8 = arith.maximumf %5, %7 : vector<8x128xf32>
    %c0_6 = arith.constant 0 : index
    %c0_7 = arith.constant 0 : index
    %9 = vector.load %arg4[%c0_6, %c0_7] : memref<128x784xf32, #tpu.memory_space<vmem>>, vector<128x784xf32>
    %cst_8 = arith.constant dense<0.000000e+00> : vector<8x784xf32>
    %10 = tpu.matmul %8, %9, %cst_8 {dimension_numbers = #tpu.dot_dimension_numbers<[1], [0], [0], [1], [0, 0, 1, 1], [], []>} : vector<8x128xf32>, vector<128x784xf32>, vector<8x784xf32> -> vector<8x784xf32>
    %c0_9 = arith.constant 0 : index
    %c0_10 = arith.constant 0 : index
    %11 = vector.load %arg5[%c0_9, %c0_10] : memref<1x784xf32, #tpu.memory_space<vmem>>, vector<1x784xf32>
    %12 = vector.broadcast %11 : vector<1x784xf32> to vector<8x784xf32>
    %13 = arith.addf %10, %12 : vector<8x784xf32>
    %14 = math.tanh %13 : vector<8x784xf32>
    %c0_11 = arith.constant 0 : index
    %c0_12 = arith.constant 0 : index
    %15 = vector.load %arg6[%c0_11, %c0_12] : memref<8x784xf32, #tpu.memory_space<vmem>>, vector<8x784xf32>
    tpu.vector_store %arg6[%c0_11, %c0_12], %14 {strides = array<i32>} : memref<8x784xf32, #tpu.memory_space<vmem>>, vector<8x784xf32>,
    return
  }
  func.func @transform_0(%arg0: i32) -> (i32, i32) {
    %c0_i32 = arith.constant 0 : i32
    %c0_i32_0 = arith.constant 0 : i32
    return %arg0, %c0_i32 : i32, i32
  }
  func.func @transform_1(%arg0: i32) -> (i32, i32) {
    %c0_i32 = arith.constant 0 : i32
    %c0_i32_0 = arith.constant 0 : i32
    %c0_i32_1 = arith.constant 0 : i32
    return %c0_i32, %c0_i32_0 : i32, i32
  }
  func.func @transform_2(%arg0: i32) -> (i32, i32) {
    %c0_i32 = arith.constant 0 : i32
    %c0_i32_0 = arith.constant 0 : i32
    %c0_i32_1 = arith.constant 0 : i32
    return %c0_i32, %c0_i32_0 : i32, i32
  }
  func.func @transform_3(%arg0: i32) -> (i32, i32) {
    %c0_i32 = arith.constant 0 : i32
    %c0_i32_0 = arith.constant 0 : i32
    %c0_i32_1 = arith.constant 0 : i32
    return %c0_i32, %c0_i32_0 : i32, i32
  }
  func.func @transform_4(%arg0: i32) -> (i32, i32) {
    %c0_i32 = arith.constant 0 : i32
    %c0_i32_0 = arith.constant 0 : i32
    %c0_i32_1 = arith.constant 0 : i32
    return %c0_i32, %c0_i32_0 : i32, i32
  }
  func.func @transform_5(%arg0: i32) -> (i32, i32) {
    %c0_i32 = arith.constant 0 : i32
    %c0_i32_0 = arith.constant 0 : i32
    return %arg0, %c0_i32 : i32, i32
  }
}

</mosaic_0001>

<llo_original>
// kernel: tpu_custom_call.1
$region0: #{tpu_custom_call.1}
  #allocation0 [shape = 'u32[]', space=smem, size = 0x4, offset = 0x4, fixed_abs, tag = 'smem constant byte address 0x4 - core index']
  #allocation1 [shape = 'u32[72,128]{1,0:T(1,128)}', space=vmem, size = 0x9000, scoped, tag = 'internal scratch']
  %s0 = inlined_call_operand.vmem [shape: f32[32,100], index: 0, kind: input, shape index: {}]
  %s1 = inlined_call_operand.vmem [shape: f32[100,128], index: 1, kind: input, shape index: {}]
  %s2 = inlined_call_operand.vmem [shape: f32[1,128], index: 2, kind: input, shape index: {}]
  %s3 = inlined_call_operand.vmem [shape: f32[128,784], index: 3, kind: input, shape index: {}]
  %s4 = inlined_call_operand.vmem [shape: f32[1,784], index: 4, kind: input, shape index: {}]
  %s5 = inlined_call_operand.hbm [shape: f32[32,784], index: 5, kind: output, shape index: {}]
  %s6 = sld [smem:[#allocation0]]
  $region53: #{tpu_custom_call.1} parent=0
    _
  %s8 = ssub.s32 1, %s6
  %s9 = scalar_select 0, %s8, %s6
  $region1: #{tpu_custom_call.1} parent=0
    #allocation2 [shape = 'u8[57344]{0}', space=vmem, size = 0xe000, scoped, tag = 'output window, operand 0']
    #allocation3 [shape = 's32[2]{0}', space=sflag, size = 0x8, scoped, tag = 'scoped memory for tpu_custom_call.1']
    %10 = vsyncpa [#allocation3], 0
    %s11 = scalar_lea.sflag [#allocation3], 1
    %12 = vsyncpa %s11, 0
    loop: start=0, step=1, limit=6
    $region2: #{tpu_custom_call.1} parent=1 // loop_pre_header
      _
    $region3: #{tpu_custom_call.1} parent=1 // loop_header
      %s14 = sphi 0, %s18
      %p15 = scmp.ge.s32.totalorder %s14, 6
      %s24 = sphi 0, %s26
      %s27 = sphi 0, %s24
      %s28 = sphi 0, %s27
      %s44 = sphi 0, %s28
      %s48 = sphi 0, %s48
      %s50 = sphi 0, %s48
      %s51 = sphi 0, %s50
      %s65 = sphi 0, %s51
      %s69 = sphi 0, %s69
      %s71 = sphi 0, %s69
      %s72 = sphi 0, %s71
      %s86 = sphi 0, %s72
      %s90 = sphi 0, %s90
      %s92 = sphi 0, %s90
      %s93 = sphi 0, %s92
      %s107 = sphi 0, %s93
      %s111 = sphi 0, %s111
      %s113 = sphi 0, %s111
      %s114 = sphi 0, %s113
      %s128 = sphi 0, %s114
      %s134 = sphi 0, %s136
      %s137 = sphi 0, %s134
      %s138 = sphi 0, %s137
      %s154 = sphi 0, %s138
    $region4: #{tpu_custom_call.1} parent=1 // loop_header_branch
      %17 = sbr.rel (%p15) target = $region8
    $region5: #{tpu_custom_call.1} parent=1 // loop_body
      %s19 = ssub.s32 %s14, 1
      %s20 = ssub.s32 %s14, 2
      %s21 = sadd.s32 %s14, 1
      %s22 = ssub.s32 %s14, %s21
      %p23 = scmp.eq.s32.totalorder %s22, 0
      %s25 = sadd.s32 %s24, 1
      %s26 = scalar_select %p23, %s24, %s25
      %p29 = pneg %p23
      %p30 = scmp.eq.s32.totalorder %s14, 3
      %p31 = por %p29, %p30
      %p32 = scmp.ne.s32.totalorder %s24, %s27
      %p33 = scmp.eq.s32.totalorder %s14, 0
      %p34 = por %p32, %p33
      %p35 = scmp.ne.s32.totalorder %s24, %s27
      %p36 = scmp.eq.s32.totalorder %s19, 3
      %p37 = por %p35, %p36
      %p38 = scmp.ne.s32.totalorder %s27, %s28
      %p39 = scmp.eq.s32.totalorder %s19, 0
      %p40 = por %p38, %p39
      %p41 = scmp.ne.s32.totalorder %s27, %s28
      %p42 = scmp.eq.s32.totalorder %s20, 3
      %p43 = por %p41, %p42
      %p45 = scmp.ne.s32.totalorder %s28, %s44
      %p46 = scmp.eq.s32.totalorder %s20, 0
      %p47 = por %p45, %p46
      %s49 = sadd.s32 %s48, 1
      %p52 = scmp.eq.s32.totalorder %s14, 3
      %p53 = scmp.ne.s32.totalorder %s48, %s50
      %p54 = scmp.eq.s32.totalorder %s14, 0
      %p55 = por %p53, %p54
      %p56 = scmp.ne.s32.totalorder %s48, %s50
      %p57 = scmp.eq.s32.totalorder %s19, 3
      %p58 = por %p56, %p57
      %p59 = scmp.ne.s32.totalorder %s50, %s51
      %p60 = scmp.eq.s32.totalorder %s19, 0
      %p61 = por %p59, %p60
      %p62 = scmp.ne.s32.totalorder %s50, %s51
      %p63 = scmp.eq.s32.totalorder %s20, 3
      %p64 = por %p62, %p63
      %p66 = scmp.ne.s32.totalorder %s51, %s65
      %p67 = scmp.eq.s32.totalorder %s20, 0
      %p68 = por %p66, %p67
      %s70 = sadd.s32 %s69, 1
      %p73 = scmp.eq.s32.totalorder %s14, 3
      %p74 = scmp.ne.s32.totalorder %s69, %s71
      %p75 = scmp.eq.s32.totalorder %s14, 0
      %p76 = por %p74, %p75
      %p77 = scmp.ne.s32.totalorder %s69, %s71
      %p78 = scmp.eq.s32.totalorder %s19, 3
      %p79 = por %p77, %p78
      %p80 = scmp.ne.s32.totalorder %s71, %s72
      %p81 = scmp.eq.s32.totalorder %s19, 0
      %p82 = por %p80, %p81
      %p83 = scmp.ne.s32.totalorder %s71, %s72
      %p84 = scmp.eq.s32.totalorder %s20, 3
      %p85 = por %p83, %p84
      %p87 = scmp.ne.s32.totalorder %s72, %s86
      %p88 = scmp.eq.s32.totalorder %s20, 0
      %p89 = por %p87, %p88
      %s91 = sadd.s32 %s90, 1
      %p94 = scmp.eq.s32.totalorder %s14, 3
      %p95 = scmp.ne.s32.totalorder %s90, %s92
      %p96 = scmp.eq.s32.totalorder %s14, 0
      %p97 = por %p95, %p96
      %p98 = scmp.ne.s32.totalorder %s90, %s92
      %p99 = scmp.eq.s32.totalorder %s19, 3
      %p100 = por %p98, %p99
      %p101 = scmp.ne.s32.totalorder %s92, %s93
      %p102 = scmp.eq.s32.totalorder %s19, 0
      %p103 = por %p101, %p102
      %p104 = scmp.ne.s32.totalorder %s92, %s93
      %p105 = scmp.eq.s32.totalorder %s20, 3
      %p106 = por %p104, %p105
      %p108 = scmp.ne.s32.totalorder %s93, %s107
      %p109 = scmp.eq.s32.totalorder %s20, 0
      %p110 = por %p108, %p109
      %s112 = sadd.s32 %s111, 1
      %p115 = scmp.eq.s32.totalorder %s14, 3
      %p116 = scmp.ne.s32.totalorder %s111, %s113
      %p117 = scmp.eq.s32.totalorder %s14, 0
      %p118 = por %p116, %p117
      %p119 = scmp.ne.s32.totalorder %s111, %s113
      %p120 = scmp.eq.s32.totalorder %s19, 3
      %p121 = por %p119, %p120
      %p122 = scmp.ne.s32.totalorder %s113, %s114
      %p123 = scmp.eq.s32.totalorder %s19, 0
      %p124 = por %p122, %p123
      %p125 = scmp.ne.s32.totalorder %s113, %s114
      %p126 = scmp.eq.s32.totalorder %s20, 3
      %p127 = por %p125, %p126
      %p129 = scmp.ne.s32.totalorder %s114, %s128
      %p130 = scmp.eq.s32.totalorder %s20, 0
      %p131 = por %p129, %p130
      %s132 = ssub.s32 %s14, %s21
      %p133 = scmp.eq.s32.totalorder %s132, 0
      %s135 = sadd.s32 %s134, 1
      %s136 = scalar_select %p133, %s134, %s135
      %p139 = pneg %p133
      %p140 = scmp.eq.s32.totalorder %s14, 3
      %p141 = por %p139, %p140
      %p142 = scmp.ne.s32.totalorder %s134, %s137
      %p143 = scmp.eq.s32.totalorder %s14, 0
      %p144 = por %p142, %p143
      %p145 = scmp.ne.s32.totalorder %s134, %s137
      %p146 = scmp.eq.s32.totalorder %s19, 3
      %p147 = por %p145, %p146
      %p148 = scmp.ne.s32.totalorder %s137, %s138
      %p149 = scmp.eq.s32.totalorder %s19, 0
      %p150 = por %p148, %p149
      %p151 = scmp.ne.s32.totalorder %s137, %s138
      %p152 = scmp.eq.s32.totalorder %s20, 3
      %p153 = por %p151, %p152
      %p155 = scmp.ne.s32.totalorder %s138, %s154
      %p156 = scmp.eq.s32.totalorder %s20, 0
      %p157 = por %p155, %p156
      %p158 = scmp.le.s32.totalorder 1, %s14
      %p159 = scmp.lt.s32.totalorder %s14, 5
      %p160 = pnand %p158, %p159
      %p161 = pneg %p160
      // Predicated region
      $region9: #{tpu_custom_call.1} parent=5 // pred_check
        _
      $region10: #{tpu_custom_call.1} parent=5 // pred_check_branch
        %163 = sbr.rel (%p160) target = $region12
      $region11: #{tpu_custom_call.1} parent=5 // pred_region
        %s164 = ssub.s32 %s14, 1
        // Predicated region
        $region13: #{tpu_custom_call.1} parent=11 // pred_check
          %p165 = pneg %p61
        $region14: #{tpu_custom_call.1} parent=11 // pred_check_branch
          %167 = sbr.rel (%p165) target = $region16
        $region15: #{tpu_custom_call.1} parent=11 // pred_region
          _
        $region16: #{tpu_custom_call.1} parent=11 // pred_fallthru
          _
        // Predicated region
        $region17: #{tpu_custom_call.1} parent=11 // pred_check
          %p168 = pneg %p82
        $region18: #{tpu_custom_call.1} parent=11 // pred_check_branch
          %170 = sbr.rel (%p168) target = $region20
        $region19: #{tpu_custom_call.1} parent=11 // pred_region
          _
        $region20: #{tpu_custom_call.1} parent=11 // pred_fallthru
          _
        // Predicated region
        $region21: #{tpu_custom_call.1} parent=11 // pred_check
          %p171 = pneg %p103
        $region22: #{tpu_custom_call.1} parent=11 // pred_check_branch
          %173 = sbr.rel (%p171) target = $region24
        $region23: #{tpu_custom_call.1} parent=11 // pred_region
          _
        $region24: #{tpu_custom_call.1} parent=11 // pred_fallthru
          _
        // Predicated region
        $region25: #{tpu_custom_call.1} parent=11 // pred_check
          %p174 = pneg %p124
        $region26: #{tpu_custom_call.1} parent=11 // pred_check_branch
          %176 = sbr.rel (%p174) target = $region28
        $region27: #{tpu_custom_call.1} parent=11 // pred_region
          _
        $region28: #{tpu_custom_call.1} parent=11 // pred_fallthru
          _
      $region12: #{tpu_custom_call.1} parent=5 // pred_fallthru
        _
      %p177 = scmp.lt.s32.totalorder %s14, 4
      // Predicated region
      $region29: #{tpu_custom_call.1} parent=5 // pred_check
        %p178 = pneg %p177
      $region30: #{tpu_custom_call.1} parent=5 // pred_check_branch
        %180 = sbr.rel (%p178) target = $region32
      $region31: #{tpu_custom_call.1} parent=5 // pred_region
        // Predicated region
        $region33: #{tpu_custom_call.1} parent=31 // pred_check
          %p181 = pneg %p34
        $region34: #{tpu_custom_call.1} parent=31 // pred_check_branch
          %183 = sbr.rel (%p181) target = $region36
        $region35: #{tpu_custom_call.1} parent=31 // pred_region
          %p184 = scmp.lt.s32.totalorder %s14, 3
          %s185 = scalar_select %p184, %s14, 3
          %s186 = smul.addr %s185, 8
          %s187 = scalar_lea.vmem %s0, %s186
        $region36: #{tpu_custom_call.1} parent=31 // pred_fallthru
          _
      $region32: #{tpu_custom_call.1} parent=5 // pred_fallthru
        _
      %p188 = scmp.le.s32.totalorder 1, %s14
      %p189 = scmp.lt.s32.totalorder %s14, 5
      %p190 = pnand %p188, %p189
      %p191 = pneg %p190
      // Predicated region
      $region37: #{tpu_custom_call.1} parent=5 // pred_check
        _
      $region38: #{tpu_custom_call.1} parent=5 // pred_check_branch
        %193 = sbr.rel (%p190) target = $region40
      $region39: #{tpu_custom_call.1} parent=5 // pred_region
        %s194 = ssub.s32 %s14, 1
        %p195 = scmp.lt.s32.totalorder %s19, 3
        %s196 = scalar_select %p195, %s19, 3
        %s197 = smul.addr %s196, 8
        %s198 = scalar_lea.vmem %s0, %s197
        %p199 = pneg %p40
        %p200 = pneg %p37
        %p201 = pneg %p61
        %p202 = pneg %p58
        %p203 = pneg %p82
        %p204 = pneg %p79
        %p205 = pneg %p103
        %p206 = pneg %p100
        %p207 = pneg %p124
        %p208 = pneg %p121
        %p209 = pneg %p150
        %p210 = pneg %p147
        %s211 = sand.u32 %s137, 1
        %s212 = scalar_lea.sflag [#allocation3], %s211
        %s213 = sand.u32 %s137, 1
        %s214 = smul.addr %s213, 56
        %s215 = scalar_lea.vmem [#allocation2], %s214
        %p216 = scmp.lt.s32.totalorder %s19, 3
        %s217 = scalar_select %p216, %s19, 3
        %s218 = smul.addr %s217, 8
        %s219 = scalar_lea.vmem %s0, %s218
        %v220 = vld [vmem:[%s219] sm:$0xff]
        %v221 = vld [vmem:[%s1] sm:$0xff]
        %v222 = vld [vmem:[%s1 + $0x8] sm:$0xff]
        %v223 = vld [vmem:[%s1 + $0x10] sm:$0xff]
        %v224 = vld [vmem:[%s1 + $0x18] sm:$0xff]
        %v225 = vld [vmem:[%s1 + $0x20] sm:$0xff]
        %v226 = vld [vmem:[%s1 + $0x28] sm:$0xff]
        %v227 = vld [vmem:[%s1 + $0x30] sm:$0xff]
        %v228 = vld [vmem:[%s1 + $0x38] sm:$0xff]
        %v229 = vld [vmem:[%s1 + $0x40] sm:$0xff]
        %v230 = vld [vmem:[%s1 + $0x48] sm:$0xff]
        %v231 = vld [vmem:[%s1 + $0x50] sm:$0xff]
        %v232 = vld [vmem:[%s1 + $0x58] sm:$0xff]
        %v233 = vld [vmem:[%s1 + $0x60] sm:$0xf]
        %v234 = vld [vmem:[%s2] sm:$0x1]
        %v236 = vperm.slane %v234, 0
        %vm238 = vcmask 818176
        %v240 = vsel %vm238, %v220, 0
        %vm242 = vcmask 1043456
        %v244 = vsel %vm242, %v233, 0
        %246 = vmatpush.msra.mxu0 0.0
        %247 = vmatpush.msra.mxu0 0.0
        %248 = vmatpush.msra.mxu0 0.0
        %249 = vmatpush.msra.mxu0 %v244
        %250 = vmatpush.msra.mxu0 %v232
        %251 = vmatpush.msra.mxu0 %v231
        %252 = vmatpush.msra.mxu0 %v230
        %253 = vmatpush.msra.mxu0 %v229
        %254 = vmatpush.msra.mxu0 %v228
        %255 = vmatpush.msra.mxu0 %v227
        %256 = vmatpush.msra.mxu0 %v226
        %257 = vmatpush.msra.mxu0 %v225
        %258 = vmatpush.msra.mxu0 %v224
        %259 = vmatpush.msra.mxu0 %v223
        %260 = vmatpush.msra.mxu0 %v222
        %261 = vmatpush.msra.mxu0 %v221
        %262 = vmatmul.f32.gmra.mxu0 %v240
        %v263 = vpop.f32.mrf.mxu0
        %v264 = vadd.f32 %v236, %v263
        %265 = vdwg.mxu0
        %v266 = vmul.f32 %v264, 0.2
        %v267 = vmax.f32 %v264, %v266
        %v268 = vld [vmem:[%s3] sm:$0xff]
        %v269 = vld [vmem:[%s3 + $0x8] sm:$0xff]
        %v270 = vld [vmem:[%s3 + $0x10] sm:$0xff]
        %v271 = vld [vmem:[%s3 + $0x18] sm:$0xff]
        %v272 = vld [vmem:[%s3 + $0x20] sm:$0xff]
        %v273 = vld [vmem:[%s3 + $0x28] sm:$0xff]
        %v274 = vld [vmem:[%s3 + $0x30] sm:$0xff]
        %v275 = vld [vmem:[%s3 + $0x38] sm:$0xff]
        %v276 = vld [vmem:[%s3 + $0x40] sm:$0xff]
        %v277 = vld [vmem:[%s3 + $0x48] sm:$0xff]
        %v278 = vld [vmem:[%s3 + $0x50] sm:$0xff]
        %v279 = vld [vmem:[%s3 + $0x58] sm:$0xff]
        %v280 = vld [vmem:[%s3 + $0x60] sm:$0xff]
        %v281 = vld [vmem:[%s3 + $0x68] sm:$0xff]
        %v282 = vld [vmem:[%s3 + $0x70] sm:$0xff]
        %v283 = vld [vmem:[%s3 + $0x78] sm:$0xff]
        %v284 = vld [vmem:[%s3 + $0x80] sm:$0xff]
        %v285 = vld [vmem:[%s3 + $0x88] sm:$0xff]
        %v286 = vld [vmem:[%s3 + $0x90] sm:$0xff]
        %v287 = vld [vmem:[%s3 + $0x98] sm:$0xff]
        %v288 = vld [vmem:[%s3 + $0xa0] sm:$0xff]
        %v289 = vld [vmem:[%s3 + $0xa8] sm:$0xff]
        %v290 = vld [vmem:[%s3 + $0xb0] sm:$0xff]
        %v291 = vld [vmem:[%s3 + $0xb8] sm:$0xff]
        %v292 = vld [vmem:[%s3 + $0xc0] sm:$0xff]
        %v293 = vld [vmem:[%s3 + $0xc8] sm:$0xff]
        %v294 = vld [vmem:[%s3 + $0xd0] sm:$0xff]
        %v295 = vld [vmem:[%s3 + $0xd8] sm:$0xff]
        %v296 = vld [vmem:[%s3 + $0xe0] sm:$0xff]
        %v297 = vld [vmem:[%s3 + $0xe8] sm:$0xff]
        %v298 = vld [vmem:[%s3 + $0xf0] sm:$0xff]
        %v299 = vld [vmem:[%s3 + $0xf8] sm:$0xff]
        %v300 = vld [vmem:[%s3 + $0x100] sm:$0xff]
        %v301 = vld [vmem:[%s3 + $0x108] sm:$0xff]
        %v302 = vld [vmem:[%s3 + $0x110] sm:$0xff]
        %v303 = vld [vmem:[%s3 + $0x118] sm:$0xff]
        %v304 = vld [vmem:[%s3 + $0x120] sm:$0xff]
        %v305 = vld [vmem:[%s3 + $0x128] sm:$0xff]
        %v306 = vld [vmem:[%s3 + $0x130] sm:$0xff]
        %v307 = vld [vmem:[%s3 + $0x138] sm:$0xff]
        %v308 = vld [vmem:[%s3 + $0x140] sm:$0xff]
        %v309 = vld [vmem:[%s3 + $0x148] sm:$0xff]
        %v310 = vld [vmem:[%s3 + $0x150] sm:$0xff]
        %v311 = vld [vmem:[%s3 + $0x158] sm:$0xff]
        %v312 = vld [vmem:[%s3 + $0x160] sm:$0xff]
        %v313 = vld [vmem:[%s3 + $0x168] sm:$0xff]
        %v314 = vld [vmem:[%s3 + $0x170] sm:$0xff]
        %v315 = vld [vmem:[%s3 + $0x178] sm:$0xff]
        %v316 = vld [vmem:[%s3 + $0x180] sm:$0xff]
        %v317 = vld [vmem:[%s3 + $0x188] sm:$0xff]
        %v318 = vld [vmem:[%s3 + $0x190] sm:$0xff]
        %v319 = vld [vmem:[%s3 + $0x198] sm:$0xff]
        %v320 = vld [vmem:[%s3 + $0x1a0] sm:$0xff]
        %v321 = vld [vmem:[%s3 + $0x1a8] sm:$0xff]
        %v322 = vld [vmem:[%s3 + $0x1b0] sm:$0xff]
        %v323 = vld [vmem:[%s3 + $0x1b8] sm:$0xff]
        %v324 = vld [vmem:[%s3 + $0x1c0] sm:$0xff]
        %v325 = vld [vmem:[%s3 + $0x1c8] sm:$0xff]
        %v326 = vld [vmem:[%s3 + $0x1d0] sm:$0xff]
        %v327 = vld [vmem:[%s3 + $0x1d8] sm:$0xff]
        %v328 = vld [vmem:[%s3 + $0x1e0] sm:$0xff]
        %v329 = vld [vmem:[%s3 + $0x1e8] sm:$0xff]
        %v330 = vld [vmem:[%s3 + $0x1f0] sm:$0xff]
        %v331 = vld [vmem:[%s3 + $0x1f8] sm:$0xff]
        %v332 = vld [vmem:[%s3 + $0x200] sm:$0xff]
        %v333 = vld [vmem:[%s3 + $0x208] sm:$0xff]
        %v334 = vld [vmem:[%s3 + $0x210] sm:$0xff]
        %v335 = vld [vmem:[%s3 + $0x218] sm:$0xff]
        %v336 = vld [vmem:[%s3 + $0x220] sm:$0xff]
        %v337 = vld [vmem:[%s3 + $0x228] sm:$0xff]
        %v338 = vld [vmem:[%s3 + $0x230] sm:$0xff]
        %v339 = vld [vmem:[%s3 + $0x238] sm:$0xff]
        %v340 = vld [vmem:[%s3 + $0x240] sm:$0xff]
        %v341 = vld [vmem:[%s3 + $0x248] sm:$0xff]
        %v342 = vld [vmem:[%s3 + $0x250] sm:$0xff]
        %v343 = vld [vmem:[%s3 + $0x258] sm:$0xff]
        %v344 = vld [vmem:[%s3 + $0x260] sm:$0xff]
        %v345 = vld [vmem:[%s3 + $0x268] sm:$0xff]
        %v346 = vld [vmem:[%s3 + $0x270] sm:$0xff]
        %v347 = vld [vmem:[%s3 + $0x278] sm:$0xff]
        %v348 = vld [vmem:[%s3 + $0x280] sm:$0xff]
        %v349 = vld [vmem:[%s3 + $0x288] sm:$0xff]
        %v350 = vld [vmem:[%s3 + $0x290] sm:$0xff]
        %v351 = vld [vmem:[%s3 + $0x298] sm:$0xff]
        %v352 = vld [vmem:[%s3 + $0x2a0] sm:$0xff]
        %v353 = vld [vmem:[%s3 + $0x2a8] sm:$0xff]
        %v354 = vld [vmem:[%s3 + $0x2b0] sm:$0xff]
        %v355 = vld [vmem:[%s3 + $0x2b8] sm:$0xff]
        %v356 = vld [vmem:[%s3 + $0x2c0] sm:$0xff]
        %v357 = vld [vmem:[%s3 + $0x2c8] sm:$0xff]
        %v358 = vld [vmem:[%s3 + $0x2d0] sm:$0xff]
        %v359 = vld [vmem:[%s3 + $0x2d8] sm:$0xff]
        %v360 = vld [vmem:[%s3 + $0x2e0] sm:$0xff]
        %v361 = vld [vmem:[%s3 + $0x2e8] sm:$0xff]
        %v362 = vld [vmem:[%s3 + $0x2f0] sm:$0xff]
        %v363 = vld [vmem:[%s3 + $0x2f8] sm:$0xff]
        %v364 = vld [vmem:[%s3 + $0x300] sm:$0xff]
        %v365 = vld [vmem:[%s3 + $0x308] sm:$0xff]
        %v366 = vld [vmem:[%s3 + $0x310] sm:$0xff]
        %v367 = vld [vmem:[%s3 + $0x318] sm:$0xff]
        %v368 = vld [vmem:[%s3 + $0x320] sm:$0xff]
        %v369 = vld [vmem:[%s3 + $0x328] sm:$0xff]
        %v370 = vld [vmem:[%s3 + $0x330] sm:$0xff]
        %v371 = vld [vmem:[%s3 + $0x338] sm:$0xff]
        %v372 = vld [vmem:[%s3 + $0x340] sm:$0xff]
        %v373 = vld [vmem:[%s3 + $0x348] sm:$0xff]
        %v374 = vld [vmem:[%s3 + $0x350] sm:$0xff]
        %v375 = vld [vmem:[%s3 + $0x358] sm:$0xff]
        %v376 = vld [vmem:[%s3 + $0x360] sm:$0xff]
        %v377 = vld [vmem:[%s3 + $0x368] sm:$0xff]
        %v378 = vld [vmem:[%s3 + $0x370] sm:$0xff]
        %v379 = vld [vmem:[%s3 + $0x378] sm:$0xff]
        %v380 = vld [vmem:[%s4] sm:$0x7f]
        %v382 = vperm.slane %v380, 0
        %v383 = vperm.slane %v380, 1
        %v384 = vperm.slane %v380, 2
        %v385 = vperm.slane %v380, 3
        %v386 = vperm.slane %v380, 4
        %v387 = vperm.slane %v380, 5
        %v388 = vperm.slane %v380, 6
        %396 = vmatpush.msra.mxu0 %v373
        %397 = vmatpush.msra.mxu0 %v366
        %398 = vmatpush.msra.mxu0 %v359
        %399 = vmatpush.msra.mxu0 %v352
        %400 = vmatpush.msra.mxu0 %v345
        %401 = vmatpush.msra.mxu0 %v338
        %402 = vmatpush.msra.mxu0 %v331
        %403 = vmatpush.msra.mxu0 %v324
        %404 = vmatpush.msra.mxu0 %v317
        %405 = vmatpush.msra.mxu0 %v310
        %406 = vmatpush.msra.mxu0 %v303
        %407 = vmatpush.msra.mxu0 %v296
        %408 = vmatpush.msra.mxu0 %v289
        %409 = vmatpush.msra.mxu0 %v282
        %410 = vmatpush.msra.mxu0 %v275
        %411 = vmatpush.msra.mxu0 %v268
        %412 = vmatmul.f32.gmra.mxu0 %v267
        %v413 = vpop.f32.mrf.mxu0
        %v414 = vadd.f32 %v382, %v413
        %415 = vdwg.mxu0
        %416 = vmatpush.msra.mxu0 %v374
        %417 = vmatpush.msra.mxu0 %v367
        %418 = vmatpush.msra.mxu0 %v360
        %419 = vmatpush.msra.mxu0 %v353
        %420 = vmatpush.msra.mxu0 %v346
        %421 = vmatpush.msra.mxu0 %v339
        %422 = vmatpush.msra.mxu0 %v332
        %423 = vmatpush.msra.mxu0 %v325
        %424 = vmatpush.msra.mxu0 %v318
        %425 = vmatpush.msra.mxu0 %v311
        %426 = vmatpush.msra.mxu0 %v304
        %427 = vmatpush.msra.mxu0 %v297
        %428 = vmatpush.msra.mxu0 %v290
        %429 = vmatpush.msra.mxu0 %v283
        %430 = vmatpush.msra.mxu0 %v276
        %431 = vmatpush.msra.mxu0 %v269
        %432 = vmatmul.f32.gmra.mxu0 %v267
        %v433 = vpop.f32.mrf.mxu0
        %v434 = vadd.f32 %v383, %v433
        %435 = vdwg.mxu0
        %436 = vmatpush.msra.mxu0 %v375
        %437 = vmatpush.msra.mxu0 %v368
        %438 = vmatpush.msra.mxu0 %v361
        %439 = vmatpush.msra.mxu0 %v354
        %440 = vmatpush.msra.mxu0 %v347
        %441 = vmatpush.msra.mxu0 %v340
        %442 = vmatpush.msra.mxu0 %v333
        %443 = vmatpush.msra.mxu0 %v326
        %444 = vmatpush.msra.mxu0 %v319
        %445 = vmatpush.msra.mxu0 %v312
        %446 = vmatpush.msra.mxu0 %v305
        %447 = vmatpush.msra.mxu0 %v298
        %448 = vmatpush.msra.mxu0 %v291
        %449 = vmatpush.msra.mxu0 %v284
        %450 = vmatpush.msra.mxu0 %v277
        %451 = vmatpush.msra.mxu0 %v270
        %452 = vmatmul.f32.gmra.mxu0 %v267
        %v453 = vpop.f32.mrf.mxu0
        %v454 = vadd.f32 %v384, %v453
        %455 = vdwg.mxu0
        %456 = vmatpush.msra.mxu0 %v376
        %457 = vmatpush.msra.mxu0 %v369
        %458 = vmatpush.msra.mxu0 %v362
        %459 = vmatpush.msra.mxu0 %v355
        %460 = vmatpush.msra.mxu0 %v348
        %461 = vmatpush.msra.mxu0 %v341
        %462 = vmatpush.msra.mxu0 %v334
        %463 = vmatpush.msra.mxu0 %v327
        %464 = vmatpush.msra.mxu0 %v320
        %465 = vmatpush.msra.mxu0 %v313
        %466 = vmatpush.msra.mxu0 %v306
        %467 = vmatpush.msra.mxu0 %v299
        %468 = vmatpush.msra.mxu0 %v292
        %469 = vmatpush.msra.mxu0 %v285
        %470 = vmatpush.msra.mxu0 %v278
        %471 = vmatpush.msra.mxu0 %v271
        %472 = vmatmul.f32.gmra.mxu0 %v267
        %v473 = vpop.f32.mrf.mxu0
        %v474 = vadd.f32 %v385, %v473
        %475 = vdwg.mxu0
        %476 = vmatpush.msra.mxu0 %v377
        %477 = vmatpush.msra.mxu0 %v370
        %478 = vmatpush.msra.mxu0 %v363
        %479 = vmatpush.msra.mxu0 %v356
        %480 = vmatpush.msra.mxu0 %v349
        %481 = vmatpush.msra.mxu0 %v342
        %482 = vmatpush.msra.mxu0 %v335
        %483 = vmatpush.msra.mxu0 %v328
        %484 = vmatpush.msra.mxu0 %v321
        %485 = vmatpush.msra.mxu0 %v314
        %486 = vmatpush.msra.mxu0 %v307
        %487 = vmatpush.msra.mxu0 %v300
        %488 = vmatpush.msra.mxu0 %v293
        %489 = vmatpush.msra.mxu0 %v286
        %490 = vmatpush.msra.mxu0 %v279
        %491 = vmatpush.msra.mxu0 %v272
        %492 = vmatmul.f32.gmra.mxu0 %v267
        %v493 = vpop.f32.mrf.mxu0
        %v494 = vadd.f32 %v386, %v493
        %495 = vdwg.mxu0
        %496 = vmatpush.msra.mxu0 %v378
        %497 = vmatpush.msra.mxu0 %v371
        %498 = vmatpush.msra.mxu0 %v364
        %499 = vmatpush.msra.mxu0 %v357
        %500 = vmatpush.msra.mxu0 %v350
        %501 = vmatpush.msra.mxu0 %v343
        %502 = vmatpush.msra.mxu0 %v336
        %503 = vmatpush.msra.mxu0 %v329
        %504 = vmatpush.msra.mxu0 %v322
        %505 = vmatpush.msra.mxu0 %v315
        %506 = vmatpush.msra.mxu0 %v308
        %507 = vmatpush.msra.mxu0 %v301
        %508 = vmatpush.msra.mxu0 %v294
        %509 = vmatpush.msra.mxu0 %v287
        %510 = vmatpush.msra.mxu0 %v280
        %511 = vmatpush.msra.mxu0 %v273
        %512 = vmatmul.f32.gmra.mxu0 %v267
        %v513 = vpop.f32.mrf.mxu0
        %v514 = vadd.f32 %v387, %v513
        %515 = vdwg.mxu0
        %516 = vmatpush.msra.mxu0 %v379
        %517 = vmatpush.msra.mxu0 %v372
        %518 = vmatpush.msra.mxu0 %v365
        %519 = vmatpush.msra.mxu0 %v358
        %520 = vmatpush.msra.mxu0 %v351
        %521 = vmatpush.msra.mxu0 %v344
        %522 = vmatpush.msra.mxu0 %v337
        %523 = vmatpush.msra.mxu0 %v330
        %524 = vmatpush.msra.mxu0 %v323
        %525 = vmatpush.msra.mxu0 %v316
        %526 = vmatpush.msra.mxu0 %v309
        %527 = vmatpush.msra.mxu0 %v302
        %528 = vmatpush.msra.mxu0 %v295
        %529 = vmatpush.msra.mxu0 %v288
        %530 = vmatpush.msra.mxu0 %v281
        %531 = vmatpush.msra.mxu0 %v274
        %532 = vmatmul.f32.gmra.mxu0 %v267
        %v533 = vpop.f32.mrf.mxu0
        %v534 = vadd.f32 %v388, %v533
        %535 = vdwg.mxu0
        %v536 = vtanh.pop %v414
        %v537 = vtanh.pop %v434
        %v538 = vtanh.pop %v454
        %v539 = vtanh.pop %v474
        %v540 = vtanh.pop %v494
        %v541 = vtanh.pop %v514
        %v542 = vtanh.pop %v534
        %543 = vst [vmem:[%s215] sm:$0xff] %v536
        %544 = vst [vmem:[%s215 + $0x8] sm:$0xff] %v537
        %545 = vst [vmem:[%s215 + $0x10] sm:$0xff] %v538
        %546 = vst [vmem:[%s215 + $0x18] sm:$0xff] %v539
        %547 = vst [vmem:[%s215 + $0x20] sm:$0xff] %v540
        %548 = vst [vmem:[%s215 + $0x28] sm:$0xff] %v541
        %vm549 = vcmask 130048
        %550 = vst.msk [vmem:[%s215 + $0x30] sm:$0xff] %vm549, %v542
        %s551 = sand.u32 %s137, 1
        %s552 = scalar_lea.sflag [#allocation3], %s551
        %s553 = sand.u32 %s137, 1
        %s554 = smul.addr %s553, 56
        %s555 = scalar_lea.vmem [#allocation2], %s554
        // Predicated region
        $region41: #{tpu_custom_call.1} parent=39 // pred_check
          %p556 = pneg %p147
        $region42: #{tpu_custom_call.1} parent=39 // pred_check_branch
          %558 = sbr.rel (%p556) target = $region44
        $region43: #{tpu_custom_call.1} parent=39 // pred_region
          %560 = vsyncadd %s552, 0
          %s561 = smul.addr %s19, 7
          %s562 = smul.addr %s561, 8
          %s563 = scalar_lea.hbm %s5, %s562
          %s565 = sshll.u32 %s555, 4
          %s566 = int_to_ptr.vmem [resolvable:$true] %s565
          %s567 = sshll.u32 %s563, 4
          %s568 = int_to_ptr.hbm [resolvable:$true] %s567
          %570 = dma.vmem_to_hbm [thread:$0]  %s566, 896, %s568, %s552
        $region44: #{tpu_custom_call.1} parent=39 // pred_fallthru
          _
      $region40: #{tpu_custom_call.1} parent=5 // pred_fallthru
        _
      %p571 = scmp.le.s32.totalorder 2, %s14
      // Predicated region
      $region45: #{tpu_custom_call.1} parent=5 // pred_check
        %p572 = pneg %p571
      $region46: #{tpu_custom_call.1} parent=5 // pred_check_branch
        %574 = sbr.rel (%p572) target = $region48
      $region47: #{tpu_custom_call.1} parent=5 // pred_region
        %s575 = ssub.s32 %s14, 2
        // Predicated region
        $region49: #{tpu_custom_call.1} parent=47 // pred_check
          %p576 = pneg %p153
        $region50: #{tpu_custom_call.1} parent=47 // pred_check_branch
          %578 = sbr.rel (%p576) target = $region52
        $region51: #{tpu_custom_call.1} parent=47 // pred_region
          %s579 = sand.u32 %s138, 1
          %s580 = scalar_lea.sflag [#allocation3], %s579
          %s581 = sand.u32 %s138, 1
          %s582 = smul.addr %s581, 56
          %s583 = scalar_lea.vmem [#allocation2], %s582
          %585 = dma.done %s580, 896
        $region52: #{tpu_custom_call.1} parent=47 // pred_fallthru
          _
      $region48: #{tpu_custom_call.1} parent=5 // pred_fallthru
        _
    $region6: #{tpu_custom_call.1} parent=1 // loop_footer
      %s18 = sadd.s32 1, %s14
    $region7: #{tpu_custom_call.1} parent=1 // loop_footer_branch
      %13 = sbr.rel target = $region3
    $region8: #{tpu_custom_call.1} parent=1 // loop_exit
      _
    %586 = vsyncpa [#allocation3], 1
    %s587 = scalar_lea.sflag [#allocation3], 1
    %588 = vsyncpa %s587, 1

</llo_original>
